<compile_context>
chip_gen: v6e
topology: v6e:2x2x1
jax: 0.10.0
libtpu: 0.0.40
codegen_flags: <defaults>
</compile_context>

<pallas_src>
import jax
import jax.numpy as jnp
from jax import lax
from jax.experimental import pallas as pl
from jax.experimental.pallas import tpu as pltpu


def _maxpool2x2_kernel(x_ref, o_ref):
    """x_ref: (bR, 2*W), each row = [img row 2i | img row 2i+1]; o_ref: (bR, W//2)."""
    two_w = x_ref.shape[-1]
    width = two_w // 2          # W
    wo = width // 2             # W // 2

    # Vertical (row-pair) max: the two contiguous halves of each packed row.
    rows = jnp.maximum(x_ref[:, :width], x_ref[:, width:])            # (bR, W)

    # Horizontal (column-pair) max: lane 2j <- max(rows[2j], rows[2j+1]).
    # roll by (W-1) == cyclic left-shift by 1; odd lanes become don't-care.
    m = jnp.maximum(rows, pltpu.roll(rows, shift=width - 1, axis=1))

    # Compact the valid even lanes [0, 2, ..., W-2] down to [0, ..., Wo-1]
    # with a log2(Wo)-step shift network (rolls + selects only).
    if wo > 1:
        lane = lax.broadcasted_iota(jnp.int32, m.shape, 1)
        k = 0
        while (1 << k) < wo:
            s = 1 << k
            rolled = pltpu.roll(m, shift=width - s, axis=1)   # left-shift by s
            take = ((lane >> k) & 3) == 1
            m = jnp.where(take, rolled, m)
            k += 1

    o_ref[...] = m[:, :wo]


def maxpool2x2(x, *, vmem_budget_bytes=12 * 1024 * 1024):
    """2x2 max pool, stride 2 - matches nn.MaxPool2d(2) on NCHW."""
    n, c, h, w = x.shape
    if (h % 2) or (w % 2):                      # MaxPool2d(2) floors: drop odd edge
        h, w = (h // 2) * 2, (w // 2) * 2
        x = x[:, :, :h, :w]
    ho, wo = h // 2, w // 2
    r_total = n * c * ho

    # Free row-major reshape: row r packs the vertical row-pair of one output row.
    xr = x.reshape(r_total, 2 * w)

    itemsize = x.dtype.itemsize
    # VMEM rows pad the lane dim to 128; account for that plus double buffering
    # of both operands when choosing the row-block size (safe on 64 MiB v7x).
    per_row_vmem = (max(2 * w, 128) + max(wo, 128)) * itemsize
    b_r = max(1, vmem_budget_bytes // (2 * per_row_vmem))
    if b_r >= r_total:
        b_r = r_total                            # full extent: always legal
    else:
        b_r = max(8, (b_r // 8) * 8)             # sublane (8) alignment

    grid = (pl.cdiv(r_total, b_r),)

    out_elems = n * c * ho * wo
    cost = pl.CostEstimate(
        flops=3 * out_elems,                     # 3 compares per output element
        transcendentals=0,
        bytes_accessed=(n * c * h * w + out_elems) * itemsize,
    )

    out = pl.pallas_call(
        _maxpool2x2_kernel,
        out_shape=jax.ShapeDtypeStruct((r_total, wo), x.dtype),
        grid=grid,
        in_specs=[pl.BlockSpec((b_r, 2 * w), lambda i: (i, 0))],
        out_specs=pl.BlockSpec((b_r, wo), lambda i: (i, 0)),
        compiler_params=pltpu.CompilerParams(
            dimension_semantics=("parallel",)),
        cost_estimate=cost,
    )(xr)

    return out.reshape(n, c, ho, wo)


if __name__ == "__main__":
    key = jax.random.PRNGKey(0)
    # MaxPool2x2 has no parameters; only the input is needed.
    x = jax.random.normal(key, (2, 4, 16, 16), dtype=jnp.float32)

    y = jax.jit(maxpool2x2)(x)
    y = jax.block_until_ready(y)

    # Reference: lax.reduce_window max pool (== torch.nn.MaxPool2d(2) on NCHW).
    ref = lax.reduce_window(
        x, -jnp.inf, lax.max,
        window_dimensions=(1, 1, 2, 2),
        window_strides=(1, 1, 2, 2),
        padding="VALID",
    )

    assert y.shape == (2, 4, 8, 8), y.shape
    assert y.dtype == x.dtype
    assert jnp.array_equal(y, ref), "mismatch vs reference max pool"

    print("KERNEL_OK")
</pallas_src>

<mosaic_0001>
module attributes {stable_mosaic.version = 11 : i64} {
  func.func @_maxpool2x2_kernel(%arg0: i32, %arg1: memref<64x32xf32, #tpu.memory_space<vmem>>, %arg2: memref<64x8xf32, #tpu.memory_space<vmem>>) attributes {dimension_semantics = [#tpu.dimension_semantics<parallel>], iteration_bounds = array<i64: 1>, scalar_prefetch = 0 : i64, scratch_operands = 0 : i64, tpu.core_type = #tpu.core_type<tc>, window_params = [{transform_indices = @transform_0, window_bounds = array<i64: 64, 32>}, {transform_indices = @transform_1, window_bounds = array<i64: 64, 8>}]} {
    %c0 = arith.constant 0 : index
    %c0_0 = arith.constant 0 : index
    %0 = vector.load %arg1[%c0, %c0_0] : memref<64x32xf32, #tpu.memory_space<vmem>>, vector<64x16xf32>
    %c0_1 = arith.constant 0 : index
    %c16 = arith.constant 16 : index
    %1 = vector.load %arg1[%c0_1, %c16] : memref<64x32xf32, #tpu.memory_space<vmem>>, vector<64x16xf32>
    %2 = arith.maximumf %0, %1 : vector<64x16xf32>
    %c15_i32 = arith.constant 15 : i32
    %3 = tpu.dynamic_rotate %2 by %c15_i32 dim 1 : vector<64x16xf32>, i32 -> vector<64x16xf32>
    %4 = arith.maximumf %2, %3 : vector<64x16xf32>
    %5 = tpu.iota {dimensions = array<i32: 1>} : vector<64x16xi32>
    %c15_i32_2 = arith.constant 15 : i32
    %6 = tpu.dynamic_rotate %4 by %c15_i32_2 dim 1 : vector<64x16xf32>, i32 -> vector<64x16xf32>
    %c0_i32 = arith.constant 0 : i32
    %7 = vector.broadcast %c0_i32 : i32 to vector<64x16xi32>
    %8 = arith.shrsi %5, %7 : vector<64x16xi32>
    %c3_i32 = arith.constant 3 : i32
    %9 = vector.broadcast %c3_i32 : i32 to vector<64x16xi32>
    %10 = arith.andi %8, %9 : vector<64x16xi32>
    %c1_i32 = arith.constant 1 : i32
    %11 = vector.broadcast %c1_i32 : i32 to vector<64x16xi32>
    %12 = arith.cmpi eq, %10, %11 : vector<64x16xi32>
    %13 = arith.select %12, %6, %4 : vector<64x16xi1>, vector<64x16xf32>
    %c14_i32 = arith.constant 14 : i32
    %14 = tpu.dynamic_rotate %13 by %c14_i32 dim 1 : vector<64x16xf32>, i32 -> vector<64x16xf32>
    %c1_i32_3 = arith.constant 1 : i32
    %15 = vector.broadcast %c1_i32_3 : i32 to vector<64x16xi32>
    %16 = arith.shrsi %5, %15 : vector<64x16xi32>
    %c3_i32_4 = arith.constant 3 : i32
    %17 = vector.broadcast %c3_i32_4 : i32 to vector<64x16xi32>
    %18 = arith.andi %16, %17 : vector<64x16xi32>
    %c1_i32_5 = arith.constant 1 : i32
    %19 = vector.broadcast %c1_i32_5 : i32 to vector<64x16xi32>
    %20 = arith.cmpi eq, %18, %19 : vector<64x16xi32>
    %21 = arith.select %20, %14, %13 : vector<64x16xi1>, vector<64x16xf32>
    %c12_i32 = arith.constant 12 : i32
    %22 = tpu.dynamic_rotate %21 by %c12_i32 dim 1 : vector<64x16xf32>, i32 -> vector<64x16xf32>
    %c2_i32 = arith.constant 2 : i32
    %23 = vector.broadcast %c2_i32 : i32 to vector<64x16xi32>
    %24 = arith.shrsi %5, %23 : vector<64x16xi32>
    %c3_i32_6 = arith.constant 3 : i32
    %25 = vector.broadcast %c3_i32_6 : i32 to vector<64x16xi32>
    %26 = arith.andi %24, %25 : vector<64x16xi32>
    %c1_i32_7 = arith.constant 1 : i32
    %27 = vector.broadcast %c1_i32_7 : i32 to vector<64x16xi32>
    %28 = arith.cmpi eq, %26, %27 : vector<64x16xi32>
    %29 = arith.select %28, %22, %21 : vector<64x16xi1>, vector<64x16xf32>
    %30 = vector.extract_strided_slice %29 {offsets = [0, 0], sizes = [64, 8], strides = [1, 1]} : vector<64x16xf32> to vector<64x8xf32>
    %c0_8 = arith.constant 0 : index
    %c0_9 = arith.constant 0 : index
    %31 = vector.load %arg2[%c0_8, %c0_9] : memref<64x8xf32, #tpu.memory_space<vmem>>, vector<64x8xf32>
    tpu.vector_store %arg2[%c0_8, %c0_9], %30 {strides = array<i32>} : memref<64x8xf32, #tpu.memory_space<vmem>>, vector<64x8xf32>,
    return
  }
  func.func @transform_0(%arg0: i32) -> (i32, i32) {
    %c0_i32 = arith.constant 0 : i32
    %c0_i32_0 = arith.constant 0 : i32
    return %arg0, %c0_i32 : i32, i32
  }
  func.func @transform_1(%arg0: i32) -> (i32, i32) {
    %c0_i32 = arith.constant 0 : i32
    %c0_i32_0 = arith.constant 0 : i32
    return %arg0, %c0_i32 : i32, i32
  }
}

</mosaic_0001>

<llo_original>
// kernel: maxpool2x2.1
$region0: #{maxpool2x2.1}
  #allocation0 [shape = 'u32[]', space=smem, size = 0x4, offset = 0x4, fixed_abs, tag = 'smem constant byte address 0x4 - core index']
  #allocation1 [shape = 'u32[144,128]{1,0:T(1,128)}', space=vmem, size = 0x12000, scoped, tag = 'internal scratch']
  %s0 = inlined_call_operand.vmem [shape: f32[64,32], index: 0, kind: input, shape index: {}]
  %s1 = inlined_call_operand.hbm [shape: f32[64,8], index: 1, kind: output, shape index: {}]
  %s2 = sld [smem:[#allocation0]]
  $region14: #{maxpool2x2.1} parent=0
    _
  %s4 = ssub.s32 1, %s2
  %s5 = scalar_select 0, %s4, %s2
  $region1: #{maxpool2x2.1} parent=0
    #allocation2 [shape = 'u8[32768]{0}', space=vmem, size = 0x8000, scoped, tag = 'output window, operand 0, single buffered']
    #allocation3 [shape = 's32[1]{0}', space=sflag, size = 0x4, scoped, tag = 'scoped memory for maxpool2x2.1']
    %6 = vsyncpa [#allocation3], 0
    // Predicated region
    $region2: #{maxpool2x2.1} parent=1 // pred_check
      _
    $region3: #{maxpool2x2.1} parent=1 // pred_check_branch
      %8 = sbr.rel (0) target = $region5
    $region4: #{maxpool2x2.1} parent=1 // pred_region
      _
    $region5: #{maxpool2x2.1} parent=1 // pred_fallthru
      _
    %v9 = vld [vmem:[%s0] sm:$0xff]
    %v10 = vld [vmem:[%s0 + $0x8] sm:$0xff]
    %v11 = vld [vmem:[%s0 + $0x10] sm:$0xff]
    %v12 = vld [vmem:[%s0 + $0x18] sm:$0xff]
    %v13 = vld [vmem:[%s0 + $0x20] sm:$0xff]
    %v14 = vld [vmem:[%s0 + $0x28] sm:$0xff]
    %v15 = vld [vmem:[%s0 + $0x30] sm:$0xff]
    %v16 = vld [vmem:[%s0 + $0x38] sm:$0xff]
    %25 = vrot.lane.b32.xlu0 %v9, 112
    %v26 = vpop.permute.xlu0 %25
    %27 = vrot.lane.b32.xlu0 %v10, 112
    %v28 = vpop.permute.xlu0 %27
    %29 = vrot.lane.b32.xlu0 %v11, 112
    %v30 = vpop.permute.xlu0 %29
    %31 = vrot.lane.b32.xlu0 %v12, 112
    %v32 = vpop.permute.xlu0 %31
    %33 = vrot.lane.b32.xlu0 %v13, 112
    %v34 = vpop.permute.xlu0 %33
    %35 = vrot.lane.b32.xlu0 %v14, 112
    %v36 = vpop.permute.xlu0 %35
    %37 = vrot.lane.b32.xlu0 %v15, 112
    %v38 = vpop.permute.xlu0 %37
    %39 = vrot.lane.b32.xlu0 %v16, 112
    %v40 = vpop.permute.xlu0 %39
    %v49 = vmax.f32 %v9, %v26
    %v50 = vmax.f32 %v10, %v28
    %v51 = vmax.f32 %v11, %v30
    %v52 = vmax.f32 %v12, %v32
    %v53 = vmax.f32 %v13, %v34
    %v54 = vmax.f32 %v14, %v36
    %v55 = vmax.f32 %v15, %v38
    %v56 = vmax.f32 %v16, %v40
    %vm57 = vcmask 1047680
    %58 = vrot.lane.b32.xlu0 %v49, 16
    %v59 = vpop.permute.xlu0 %58
    %v60 = vsel %vm57, %v59, %v49
    %61 = vrot.lane.b32.xlu0 %v50, 16
    %v62 = vpop.permute.xlu0 %61
    %v63 = vsel %vm57, %v62, %v50
    %64 = vrot.lane.b32.xlu0 %v51, 16
    %v65 = vpop.permute.xlu0 %64
    %v66 = vsel %vm57, %v65, %v51
    %67 = vrot.lane.b32.xlu0 %v52, 16
    %v68 = vpop.permute.xlu0 %67
    %v69 = vsel %vm57, %v68, %v52
    %70 = vrot.lane.b32.xlu0 %v53, 16
    %v71 = vpop.permute.xlu0 %70
    %v72 = vsel %vm57, %v71, %v53
    %73 = vrot.lane.b32.xlu0 %v54, 16
    %v74 = vpop.permute.xlu0 %73
    %v75 = vsel %vm57, %v74, %v54
    %76 = vrot.lane.b32.xlu0 %v55, 16
    %v77 = vpop.permute.xlu0 %76
    %v78 = vsel %vm57, %v77, %v55
    %79 = vrot.lane.b32.xlu0 %v56, 16
    %v80 = vpop.permute.xlu0 %79
    %v81 = vsel %vm57, %v80, %v56
    %82 = vrot.lane.b32.xlu0 %v60, 16
    %v83 = vpop.permute.xlu0 %82
    %84 = vrot.lane.b32.xlu0 %v63, 16
    %v85 = vpop.permute.xlu0 %84
    %86 = vrot.lane.b32.xlu0 %v66, 16
    %v87 = vpop.permute.xlu0 %86
    %88 = vrot.lane.b32.xlu0 %v69, 16
    %v89 = vpop.permute.xlu0 %88
    %90 = vrot.lane.b32.xlu0 %v72, 16
    %v91 = vpop.permute.xlu0 %90
    %92 = vrot.lane.b32.xlu0 %v75, 16
    %v93 = vpop.permute.xlu0 %92
    %94 = vrot.lane.b32.xlu0 %v78, 16
    %v95 = vpop.permute.xlu0 %94
    %96 = vrot.lane.b32.xlu0 %v81, 16
    %v97 = vpop.permute.xlu0 %96
    %v98 = vsel %vm57, %v83, %v49
    %v99 = vsel %vm57, %v85, %v50
    %v100 = vsel %vm57, %v87, %v51
    %v101 = vsel %vm57, %v89, %v52
    %v102 = vsel %vm57, %v91, %v53
    %v103 = vsel %vm57, %v93, %v54
    %v104 = vsel %vm57, %v95, %v55
    %v105 = vsel %vm57, %v97, %v56
    %114 = vrot.lane.b32.xlu0 %v98, 127
    %v115 = vpop.permute.xlu0 %114
    %116 = vrot.lane.b32.xlu0 %v99, 127
    %v117 = vpop.permute.xlu0 %116
    %118 = vrot.lane.b32.xlu0 %v100, 127
    %v119 = vpop.permute.xlu0 %118
    %120 = vrot.lane.b32.xlu0 %v101, 127
    %v121 = vpop.permute.xlu0 %120
    %122 = vrot.lane.b32.xlu0 %v102, 127
    %v123 = vpop.permute.xlu0 %122
    %124 = vrot.lane.b32.xlu0 %v103, 127
    %v125 = vpop.permute.xlu0 %124
    %126 = vrot.lane.b32.xlu0 %v104, 127
    %v127 = vpop.permute.xlu0 %126
    %128 = vrot.lane.b32.xlu0 %v105, 127
    %v129 = vpop.permute.xlu0 %128
    %v138 = vmax.f32 %v49, %v115
    %v139 = vmax.f32 %v50, %v117
    %v140 = vmax.f32 %v51, %v119
    %v141 = vmax.f32 %v52, %v121
    %v142 = vmax.f32 %v53, %v123
    %v143 = vmax.f32 %v54, %v125
    %v144 = vmax.f32 %v55, %v127
    %v145 = vmax.f32 %v56, %v129
    %v146 = vlaneseq
    %v147 = vand.u32 %v146, 127
    %148 = vrot.lane.b32.xlu0 %v138, 16
    %v149 = vpop.permute.xlu0 %148
    %v150 = vsel %vm57, %v149, %v138
    %151 = vrot.lane.b32.xlu0 %v139, 16
    %v152 = vpop.permute.xlu0 %151
    %v153 = vsel %vm57, %v152, %v139
    %154 = vrot.lane.b32.xlu0 %v140, 16
    %v155 = vpop.permute.xlu0 %154
    %v156 = vsel %vm57, %v155, %v140
    %157 = vrot.lane.b32.xlu0 %v141, 16
    %v158 = vpop.permute.xlu0 %157
    %v159 = vsel %vm57, %v158, %v141
    %160 = vrot.lane.b32.xlu0 %v142, 16
    %v161 = vpop.permute.xlu0 %160
    %v162 = vsel %vm57, %v161, %v142
    %163 = vrot.lane.b32.xlu0 %v143, 16
    %v164 = vpop.permute.xlu0 %163
    %v165 = vsel %vm57, %v164, %v143
    %166 = vrot.lane.b32.xlu0 %v144, 16
    %v167 = vpop.permute.xlu0 %166
    %v168 = vsel %vm57, %v167, %v144
    %169 = vrot.lane.b32.xlu0 %v145, 16
    %v170 = vpop.permute.xlu0 %169
    %v171 = vsel %vm57, %v170, %v145
    %172 = vrot.lane.b32.xlu0 %v150, 16
    %v173 = vpop.permute.xlu0 %172
    %174 = vrot.lane.b32.xlu0 %v153, 16
    %v175 = vpop.permute.xlu0 %174
    %176 = vrot.lane.b32.xlu0 %v156, 16
    %v177 = vpop.permute.xlu0 %176
    %178 = vrot.lane.b32.xlu0 %v159, 16
    %v179 = vpop.permute.xlu0 %178
    %180 = vrot.lane.b32.xlu0 %v162, 16
    %v181 = vpop.permute.xlu0 %180
    %182 = vrot.lane.b32.xlu0 %v165, 16
    %v183 = vpop.permute.xlu0 %182
    %184 = vrot.lane.b32.xlu0 %v168, 16
    %v185 = vpop.permute.xlu0 %184
    %186 = vrot.lane.b32.xlu0 %v171, 16
    %v187 = vpop.permute.xlu0 %186
    %v188 = vsel %vm57, %v173, %v138
    %v189 = vsel %vm57, %v175, %v139
    %v190 = vsel %vm57, %v177, %v140
    %v191 = vsel %vm57, %v179, %v141
    %v192 = vsel %vm57, %v181, %v142
    %v193 = vsel %vm57, %v183, %v143
    %v194 = vsel %vm57, %v185, %v144
    %v195 = vsel %vm57, %v187, %v145
    %v196 = vand.u32 %v147, 3
    %vm197 = vcmp.eq.s32.totalorder %v196, 1
    %206 = vrot.lane.b32.xlu0 %v188, 127
    %v207 = vpop.permute.xlu0 %206
    %208 = vrot.lane.b32.xlu0 %v189, 127
    %v209 = vpop.permute.xlu0 %208
    %210 = vrot.lane.b32.xlu0 %v190, 127
    %v211 = vpop.permute.xlu0 %210
    %212 = vrot.lane.b32.xlu0 %v191, 127
    %v213 = vpop.permute.xlu0 %212
    %214 = vrot.lane.b32.xlu0 %v192, 127
    %v215 = vpop.permute.xlu0 %214
    %216 = vrot.lane.b32.xlu0 %v193, 127
    %v217 = vpop.permute.xlu0 %216
    %218 = vrot.lane.b32.xlu0 %v194, 127
    %v219 = vpop.permute.xlu0 %218
    %220 = vrot.lane.b32.xlu0 %v195, 127
    %v221 = vpop.permute.xlu0 %220
    %v230 = vsel %vm197, %v207, %v138
    %v231 = vsel %vm197, %v209, %v139
    %v232 = vsel %vm197, %v211, %v140
    %v233 = vsel %vm197, %v213, %v141
    %v234 = vsel %vm197, %v215, %v142
    %v235 = vsel %vm197, %v217, %v143
    %v236 = vsel %vm197, %v219, %v144
    %v237 = vsel %vm197, %v221, %v145
    %238 = vrot.lane.b32.xlu0 %v230, 16
    %v239 = vpop.permute.xlu0 %238
    %v240 = vsel %vm57, %v239, %v230
    %241 = vrot.lane.b32.xlu0 %v231, 16
    %v242 = vpop.permute.xlu0 %241
    %v243 = vsel %vm57, %v242, %v231
    %244 = vrot.lane.b32.xlu0 %v232, 16
    %v245 = vpop.permute.xlu0 %244
    %v246 = vsel %vm57, %v245, %v232
    %247 = vrot.lane.b32.xlu0 %v233, 16
    %v248 = vpop.permute.xlu0 %247
    %v249 = vsel %vm57, %v248, %v233
    %250 = vrot.lane.b32.xlu0 %v234, 16
    %v251 = vpop.permute.xlu0 %250
    %v252 = vsel %vm57, %v251, %v234
    %253 = vrot.lane.b32.xlu0 %v235, 16
    %v254 = vpop.permute.xlu0 %253
    %v255 = vsel %vm57, %v254, %v235
    %256 = vrot.lane.b32.xlu0 %v236, 16
    %v257 = vpop.permute.xlu0 %256
    %v258 = vsel %vm57, %v257, %v236
    %259 = vrot.lane.b32.xlu0 %v237, 16
    %v260 = vpop.permute.xlu0 %259
    %v261 = vsel %vm57, %v260, %v237
    %262 = vrot.lane.b32.xlu0 %v240, 16
    %v263 = vpop.permute.xlu0 %262
    %264 = vrot.lane.b32.xlu0 %v243, 16
    %v265 = vpop.permute.xlu0 %264
    %266 = vrot.lane.b32.xlu0 %v246, 16
    %v267 = vpop.permute.xlu0 %266
    %268 = vrot.lane.b32.xlu0 %v249, 16
    %v269 = vpop.permute.xlu0 %268
    %270 = vrot.lane.b32.xlu0 %v252, 16
    %v271 = vpop.permute.xlu0 %270
    %272 = vrot.lane.b32.xlu0 %v255, 16
    %v273 = vpop.permute.xlu0 %272
    %274 = vrot.lane.b32.xlu0 %v258, 16
    %v275 = vpop.permute.xlu0 %274
    %276 = vrot.lane.b32.xlu0 %v261, 16
    %v277 = vpop.permute.xlu0 %276
    %v278 = vsel %vm57, %v263, %v230
    %v279 = vsel %vm57, %v265, %v231
    %v280 = vsel %vm57, %v267, %v232
    %v281 = vsel %vm57, %v269, %v233
    %v282 = vsel %vm57, %v271, %v234
    %v283 = vsel %vm57, %v273, %v235
    %v284 = vsel %vm57, %v275, %v236
    %v285 = vsel %vm57, %v277, %v237
    %v286 = vshra.s32 %v147, 1
    %v287 = vand.u32 %v286, 3
    %vm288 = vcmp.eq.s32.totalorder %v287, 1
    %297 = vrot.lane.b32.xlu0 %v278, 126
    %v298 = vpop.permute.xlu0 %297
    %299 = vrot.lane.b32.xlu0 %v279, 126
    %v300 = vpop.permute.xlu0 %299
    %301 = vrot.lane.b32.xlu0 %v280, 126
    %v302 = vpop.permute.xlu0 %301
    %303 = vrot.lane.b32.xlu0 %v281, 126
    %v304 = vpop.permute.xlu0 %303
    %305 = vrot.lane.b32.xlu0 %v282, 126
    %v306 = vpop.permute.xlu0 %305
    %307 = vrot.lane.b32.xlu0 %v283, 126
    %v308 = vpop.permute.xlu0 %307
    %309 = vrot.lane.b32.xlu0 %v284, 126
    %v310 = vpop.permute.xlu0 %309
    %311 = vrot.lane.b32.xlu0 %v285, 126
    %v312 = vpop.permute.xlu0 %311
    %v321 = vsel %vm288, %v298, %v230
    %v322 = vsel %vm288, %v300, %v231
    %v323 = vsel %vm288, %v302, %v232
    %v324 = vsel %vm288, %v304, %v233
    %v325 = vsel %vm288, %v306, %v234
    %v326 = vsel %vm288, %v308, %v235
    %v327 = vsel %vm288, %v310, %v236
    %v328 = vsel %vm288, %v312, %v237
    %329 = vrot.lane.b32.xlu0 %v321, 16
    %v330 = vpop.permute.xlu0 %329
    %v331 = vsel %vm57, %v330, %v321
    %332 = vrot.lane.b32.xlu0 %v322, 16
    %v333 = vpop.permute.xlu0 %332
    %v334 = vsel %vm57, %v333, %v322
    %335 = vrot.lane.b32.xlu0 %v323, 16
    %v336 = vpop.permute.xlu0 %335
    %v337 = vsel %vm57, %v336, %v323
    %338 = vrot.lane.b32.xlu0 %v324, 16
    %v339 = vpop.permute.xlu0 %338
    %v340 = vsel %vm57, %v339, %v324
    %341 = vrot.lane.b32.xlu0 %v325, 16
    %v342 = vpop.permute.xlu0 %341
    %v343 = vsel %vm57, %v342, %v325
    %344 = vrot.lane.b32.xlu0 %v326, 16
    %v345 = vpop.permute.xlu0 %344
    %v346 = vsel %vm57, %v345, %v326
    %347 = vrot.lane.b32.xlu0 %v327, 16
    %v348 = vpop.permute.xlu0 %347
    %v349 = vsel %vm57, %v348, %v327
    %350 = vrot.lane.b32.xlu0 %v328, 16
    %v351 = vpop.permute.xlu0 %350
    %v352 = vsel %vm57, %v351, %v328
    %353 = vrot.lane.b32.xlu0 %v331, 16
    %v354 = vpop.permute.xlu0 %353
    %355 = vrot.lane.b32.xlu0 %v334, 16
    %v356 = vpop.permute.xlu0 %355
    %357 = vrot.lane.b32.xlu0 %v337, 16
    %v358 = vpop.permute.xlu0 %357
    %359 = vrot.lane.b32.xlu0 %v340, 16
    %v360 = vpop.permute.xlu0 %359
    %361 = vrot.lane.b32.xlu0 %v343, 16
    %v362 = vpop.permute.xlu0 %361
    %363 = vrot.lane.b32.xlu0 %v346, 16
    %v364 = vpop.permute.xlu0 %363
    %365 = vrot.lane.b32.xlu0 %v349, 16
    %v366 = vpop.permute.xlu0 %365
    %367 = vrot.lane.b32.xlu0 %v352, 16
    %v368 = vpop.permute.xlu0 %367
    %v369 = vsel %vm57, %v354, %v321
    %v370 = vsel %vm57, %v356, %v322
    %v371 = vsel %vm57, %v358, %v323
    %v372 = vsel %vm57, %v360, %v324
    %v373 = vsel %vm57, %v362, %v325
    %v374 = vsel %vm57, %v364, %v326
    %v375 = vsel %vm57, %v366, %v327
    %v376 = vsel %vm57, %v368, %v328
    %v377 = vshra.s32 %v147, 2
    %v378 = vand.u32 %v377, 3
    %vm379 = vcmp.eq.s32.totalorder %v378, 1
    %388 = vrot.lane.b32.xlu0 %v369, 124
    %v389 = vpop.permute.xlu0 %388
    %390 = vrot.lane.b32.xlu0 %v370, 124
    %v391 = vpop.permute.xlu0 %390
    %392 = vrot.lane.b32.xlu0 %v371, 124
    %v393 = vpop.permute.xlu0 %392
    %394 = vrot.lane.b32.xlu0 %v372, 124
    %v395 = vpop.permute.xlu0 %394
    %396 = vrot.lane.b32.xlu0 %v373, 124
    %v397 = vpop.permute.xlu0 %396
    %398 = vrot.lane.b32.xlu0 %v374, 124
    %v399 = vpop.permute.xlu0 %398
    %400 = vrot.lane.b32.xlu0 %v375, 124
    %v401 = vpop.permute.xlu0 %400
    %402 = vrot.lane.b32.xlu0 %v376, 124
    %v403 = vpop.permute.xlu0 %402
    %v412 = vsel %vm379, %v389, %v321
    %v413 = vsel %vm379, %v391, %v322
    %v414 = vsel %vm379, %v393, %v323
    %v415 = vsel %vm379, %v395, %v324
    %v416 = vsel %vm379, %v397, %v325
    %v417 = vsel %vm379, %v399, %v326
    %v418 = vsel %vm379, %v401, %v327
    %v419 = vsel %vm379, %v403, %v328
    %vm420 = vcmask 64512
    %421 = vst.msk [vmem:[#allocation2] sm:$0xff] %vm420, %v412
    %422 = vst.msk [vmem:[#allocation2 + $0x8] sm:$0xff] %vm420, %v413
    %423 = vst.msk [vmem:[#allocation2 + $0x10] sm:$0xff] %vm420, %v414
    %424 = vst.msk [vmem:[#allocation2 + $0x18] sm:$0xff] %vm420, %v415
    %425 = vst.msk [vmem:[#allocation2 + $0x20] sm:$0xff] %vm420, %v416
    %426 = vst.msk [vmem:[#allocation2 + $0x28] sm:$0xff] %vm420, %v417
    %427 = vst.msk [vmem:[#allocation2 + $0x30] sm:$0xff] %vm420, %v418
    %428 = vst.msk [vmem:[#allocation2 + $0x38] sm:$0xff] %vm420, %v419
    // Predicated region
    $region6: #{maxpool2x2.1} parent=1 // pred_check
      _
    $region7: #{maxpool2x2.1} parent=1 // pred_check_branch
      %430 = sbr.rel (0) target = $region9
    $region8: #{maxpool2x2.1} parent=1 // pred_region
      %s432 = ssub.s32 1024, 1024
      %433 = vsyncadd [#allocation3], %s432
      %s434 = sshll.u32 [#allocation2], 4
      %s435 = int_to_ptr.vmem [resolvable:$true] %s434
      %440 = dma.vmem_to_hbm [thread:$0]  %s435, 1024, %s1, [#allocation3], 128, 128, 8
    $region9: #{maxpool2x2.1} parent=1 // pred_fallthru
      _
    // Predicated region
    $region10: #{maxpool2x2.1} parent=1 // pred_check
      _
    $region11: #{maxpool2x2.1} parent=1 // pred_check_branch
      %442 = sbr.rel (0) target = $region13
    $region12: #{maxpool2x2.1} parent=1 // pred_region
      %443 = dma.done [#allocation3], 1024
    $region13: #{maxpool2x2.1} parent=1 // pred_fallthru
      _
    %444 = vsyncpa [#allocation3], 1

</llo_original>
